<compile_context>
chip_gen: v5e
topology: v5e:2x2
jax: 0.10.0
libtpu: 0.0.40
codegen_flags: <defaults>
</compile_context>

<pallas_src>
import functools

import jax
import jax.numpy as jnp
import numpy as np
from jax.experimental import pallas as pl
from jax.experimental.pallas import tpu as pltpu


def _identity_block_kernel(x_ref, wa_ref, wb_ref, ba_ref, bb_ref, o_ref,
                           *, L, da, db):
    """One batch block per grid step.

    x_ref : (NB, L + 2*da, Cp)  input, pre-padded along L for conv 2a,
                                channels zero-padded to Cp (lane-dense).
    wa_ref: (3*Cp, Cp)          conv-2a taps stacked along K, BN-2a scale folded.
    wb_ref: (3*Cp, Cp)          conv-2b taps stacked along K, BN-2b scale folded.
    ba_ref, bb_ref: (1, Cp)     folded BN biases.
    o_ref : (NB, L, Cp)         output.
    """
    NB = o_ref.shape[0]
    Cp = o_ref.shape[2]
    xpad = x_ref[...]

    # ---- conv 2a: three dilated taps fused into a single K=3*Cp matmul ----
    # tap k reads x[i + (k-1)*da]  (== xpad[i + k*da]).
    t0 = xpad[:, 0:L, :]
    # NOTE: offset `da`(=4) is sublane-misaligned; the relayout copy is paid
    # once and reused for both the middle tap and the residual identity.
    t1 = xpad[:, da:da + L, :]
    t2 = xpad[:, 2 * da:2 * da + L, :]
    a_op = jnp.concatenate([t0, t1, t2], axis=2).reshape(NB * L, 3 * Cp)
    h = jnp.dot(a_op, wa_ref[...], preferred_element_type=jnp.float32)
    h = jnp.maximum(h + ba_ref[...], 0.0).reshape(NB, L, Cp)   # BN 2a + relu

    # ---- conv 2b: shift h by +/- db with a zero halo (db=8 -> sublane
    # aligned), fused K=3*Cp matmul; no VMEM scratch round trip. ----
    halo = jnp.zeros((NB, db, Cp), jnp.float32)
    s0 = jnp.concatenate([halo, h[:, :L - db, :]], axis=1)     # h[i - db]
    s2 = jnp.concatenate([h[:, db:, :], halo], axis=1)         # h[i + db]
    b_op = jnp.concatenate([s0, h, s2], axis=2).reshape(NB * L, 3 * Cp)
    y = jnp.dot(b_op, wb_ref[...], preferred_element_type=jnp.float32)
    y = (y + bb_ref[...]).reshape(NB, L, Cp)                   # BN 2b

    # ---- residual add + relu ----
    o_ref[...] = jnp.maximum(y + t1, 0.0)


def identity_block(x, wa, wb,
                   gamma_a, beta_a, mean_a, var_a,
                   gamma_b, beta_b, mean_b, var_b,
                   *, dilation=(4, 8), eps=1e-5):
    """x: (N, C, L) float32, PyTorch NCW layout. Returns (N, C, L)."""
    N, C, L = x.shape
    da, db = dilation
    # Module hardcodes padding=4 / padding=8; the residual length match
    # requires padding == dilation with stride 1 and kernel size 3.
    assert (da, db) == (4, 8), "IdentityBlock kernel requires dilation=(4, 8)"
    assert wa.shape == (C, C, 3) and wb.shape == (C, C, 3)
    assert L % 8 == 0 and L > db, "L must be a multiple of 8 and > 8"

    Cp = ((C + 127) // 128) * 128          # lane-dense channel padding

    # ----- fold BN (eval mode) into conv weights; keep bias for epilogue ----
    inv_a = (gamma_a / jnp.sqrt(var_a + eps)).astype(jnp.float32)
    inv_b = (gamma_b / jnp.sqrt(var_b + eps)).astype(jnp.float32)
    ba = (beta_a - mean_a * inv_a).astype(jnp.float32)
    bb = (beta_b - mean_b * inv_b).astype(jnp.float32)

    def prep_w(w, inv):
        # (C_out, C_in, 3) -> (3, C_in, C_out), scale out-channels by BN,
        # zero-pad to (3, Cp, Cp), stack taps along K -> (3*Cp, Cp).
        wk = jnp.transpose(w, (2, 1, 0)).astype(jnp.float32) * inv[None, None, :]
        wk = jnp.pad(wk, ((0, 0), (0, Cp - C), (0, Cp - C)))
        return wk.reshape(3 * Cp, Cp)

    wa2 = prep_w(wa, inv_a)
    wb2 = prep_w(wb, inv_b)
    ba2 = jnp.pad(ba, (0, Cp - C)).reshape(1, Cp)
    bb2 = jnp.pad(bb, (0, Cp - C)).reshape(1, Cp)

    # ----- NCW -> NLC, pad channels to Cp, pad L by da for conv 2a ----------
    x_nlc = jnp.transpose(x, (0, 2, 1)).astype(jnp.float32)        # (N, L, C)
    x_pad = jnp.pad(x_nlc, ((0, 0), (da, da), (0, Cp - C)))        # (N, L+2da, Cp)

    # ----- batch blocking: amortize per-step overhead, bound VMEM use -------
    per_elem = ((L + 2 * da) + L) * Cp * 4 * 2    # in + out, double-buffered
    NB = max(1, min(N, 8, (24 << 20) // per_elem))
    Ng = pl.cdiv(N, NB)
    Npad = Ng * NB
    if Npad != N:
        x_pad = jnp.pad(x_pad, ((0, Npad - N), (0, 0), (0, 0)))

    Lp = L + 2 * da
    kernel = functools.partial(_identity_block_kernel, L=L, da=da, db=db)

    out = pl.pallas_call(
        kernel,
        out_shape=jax.ShapeDtypeStruct((Npad, L, Cp), jnp.float32),
        grid_spec=pltpu.PrefetchScalarGridSpec(
            num_scalar_prefetch=0,
            grid=(Ng,),
            in_specs=[
                pl.BlockSpec((NB, Lp, Cp), lambda n: (n, 0, 0)),
                pl.BlockSpec((3 * Cp, Cp), lambda n: (0, 0)),
                pl.BlockSpec((3 * Cp, Cp), lambda n: (0, 0)),
                pl.BlockSpec((1, Cp), lambda n: (0, 0)),
                pl.BlockSpec((1, Cp), lambda n: (0, 0)),
            ],
            out_specs=pl.BlockSpec((NB, L, Cp), lambda n: (n, 0, 0)),
        ),
        compiler_params=pltpu.CompilerParams(
            # batch blocks are independent -> shard across TCs on v7x.
            dimension_semantics=("parallel",)),
    )(x_pad, wa2, wb2, ba2, bb2)

    return jnp.transpose(out[:N, :, :C], (0, 2, 1))                # (N, C, L)


def _ref_forward(x, wa, wb,
                 gamma_a, beta_a, mean_a, var_a,
                 gamma_b, beta_b, mean_b, var_b,
                 *, dilation=(4, 8), eps=1e-5):
    """Pure-JAX reference matching the PyTorch forward (eval-mode BN)."""
    def conv1d(x, w, p, d):
        return jax.lax.conv_general_dilated(
            x, w, window_strides=(1,), padding=[(p, p)],
            rhs_dilation=(d,), dimension_numbers=('NCH', 'OIH', 'NCH'))

    def bn(x, g, b, m, v):
        return ((x - m[None, :, None]) / jnp.sqrt(v[None, :, None] + eps)
                * g[None, :, None] + b[None, :, None])

    identity = x
    h = jax.nn.relu(bn(conv1d(x, wa, 4, dilation[0]),
                       gamma_a, beta_a, mean_a, var_a))
    y = bn(conv1d(h, wb, 8, dilation[1]), gamma_b, beta_b, mean_b, var_b)
    return jax.nn.relu(y + identity)


if __name__ == "__main__":
    N, C, L = 2, 4, 16
    dilation = (4, 8)

    key = jax.random.PRNGKey(0)
    ks = jax.random.split(key, 11)

    x = jax.random.normal(ks[0], (N, C, L), jnp.float32)
    # Conv1d weights in PyTorch layout (C_out, C_in, K), bias=False.
    wa = 0.2 * jax.random.normal(ks[1], (C, C, 3), jnp.float32)
    wb = 0.2 * jax.random.normal(ks[2], (C, C, 3), jnp.float32)
    # BatchNorm1d parameters / running stats (deterministic, synthetic).
    gamma_a = 1.0 + 0.1 * jax.random.normal(ks[3], (C,), jnp.float32)
    beta_a = 0.1 * jax.random.normal(ks[4], (C,), jnp.float32)
    mean_a = 0.1 * jax.random.normal(ks[5], (C,), jnp.float32)
    var_a = jax.random.uniform(ks[6], (C,), jnp.float32, 0.5, 1.5)
    gamma_b = 1.0 + 0.1 * jax.random.normal(ks[7], (C,), jnp.float32)
    beta_b = 0.1 * jax.random.normal(ks[8], (C,), jnp.float32)
    mean_b = 0.1 * jax.random.normal(ks[9], (C,), jnp.float32)
    var_b = jax.random.uniform(ks[10], (C,), jnp.float32, 0.5, 1.5)

    out = identity_block(x, wa, wb,
                         gamma_a, beta_a, mean_a, var_a,
                         gamma_b, beta_b, mean_b, var_b,
                         dilation=dilation)
    out = jax.block_until_ready(out)

    ref = _ref_forward(x, wa, wb,
                       gamma_a, beta_a, mean_a, var_a,
                       gamma_b, beta_b, mean_b, var_b,
                       dilation=dilation)

    assert out.shape == (N, C, L)
    np.testing.assert_allclose(np.asarray(out), np.asarray(ref),
                               rtol=1e-4, atol=1e-4)
    print("KERNEL_OK")
</pallas_src>

<mosaic_0001>
module attributes {stable_mosaic.version = 11 : i64} {
  func.func @_identity_block_kernel(%arg0: i32, %arg1: memref<2x24x128xf32, #tpu.memory_space<vmem>>, %arg2: memref<384x128xf32, #tpu.memory_space<vmem>>, %arg3: memref<384x128xf32, #tpu.memory_space<vmem>>, %arg4: memref<1x128xf32, #tpu.memory_space<vmem>>, %arg5: memref<1x128xf32, #tpu.memory_space<vmem>>, %arg6: memref<2x16x128xf32, #tpu.memory_space<vmem>>) attributes {dimension_semantics = [#tpu.dimension_semantics<parallel>], iteration_bounds = array<i64: 1>, scalar_prefetch = 0 : i64, scratch_operands = 0 : i64, tpu.core_type = #tpu.core_type<tc>, window_params = [{transform_indices = @transform_0, window_bounds = array<i64: 2, 24, 128>}, {pipeline_mode = #tpu.pipeline_mode<synchronous>, transform_indices = @transform_1, window_bounds = array<i64: 384, 128>}, {pipeline_mode = #tpu.pipeline_mode<synchronous>, transform_indices = @transform_2, window_bounds = array<i64: 384, 128>}, {pipeline_mode = #tpu.pipeline_mode<synchronous>, transform_indices = @transform_3, window_bounds = array<i64: 1, 128>}, {pipeline_mode = #tpu.pipeline_mode<synchronous>, transform_indices = @transform_4, window_bounds = array<i64: 1, 128>}, {transform_indices = @transform_5, window_bounds = array<i64: 2, 16, 128>}]} {
    %c0 = arith.constant 0 : index
    %c0_0 = arith.constant 0 : index
    %c0_1 = arith.constant 0 : index
    %0 = vector.load %arg1[%c0, %c0_0, %c0_1] : memref<2x24x128xf32, #tpu.memory_space<vmem>>, vector<2x24x128xf32>
    %1 = vector.extract_strided_slice %0 {offsets = [0, 0, 0], sizes = [2, 16, 128], strides = [1, 1, 1]} : vector<2x24x128xf32> to vector<2x16x128xf32>
    %2 = vector.extract_strided_slice %0 {offsets = [0, 4, 0], sizes = [2, 16, 128], strides = [1, 1, 1]} : vector<2x24x128xf32> to vector<2x16x128xf32>
    %3 = vector.extract_strided_slice %0 {offsets = [0, 8, 0], sizes = [2, 16, 128], strides = [1, 1, 1]} : vector<2x24x128xf32> to vector<2x16x128xf32>
    %4 = tpu.concatenate %1, %2, %3 in 2 : vector<2x16x128xf32>, vector<2x16x128xf32>, vector<2x16x128xf32> -> vector<2x16x384xf32>
    %5 = vector.shape_cast %4 : vector<2x16x384xf32> to vector<32x384xf32>
    %c0_2 = arith.constant 0 : index
    %c0_3 = arith.constant 0 : index
    %6 = vector.load %arg2[%c0_2, %c0_3] : memref<384x128xf32, #tpu.memory_space<vmem>>, vector<384x128xf32>
    %cst = arith.constant dense<0.000000e+00> : vector<32x128xf32>
    %7 = tpu.matmul %5, %6, %cst {dimension_numbers = #tpu.dot_dimension_numbers<[1], [0], [0], [1], [0, 0, 1, 1], [], []>} : vector<32x384xf32>, vector<384x128xf32>, vector<32x128xf32> -> vector<32x128xf32>
    %c0_4 = arith.constant 0 : index
    %c0_5 = arith.constant 0 : index
    %8 = vector.load %arg4[%c0_4, %c0_5] : memref<1x128xf32, #tpu.memory_space<vmem>>, vector<1x128xf32>
    %9 = vector.broadcast %8 : vector<1x128xf32> to vector<32x128xf32>
    %10 = arith.addf %7, %9 : vector<32x128xf32>
    %cst_6 = arith.constant 0.000000e+00 : f32
    %11 = vector.broadcast %cst_6 : f32 to vector<32x128xf32>
    %12 = arith.maximumf %10, %11 : vector<32x128xf32>
    %13 = vector.shape_cast %12 : vector<32x128xf32> to vector<2x16x128xf32>
    %cst_7 = arith.constant 0.000000e+00 : f32
    %14 = vector.broadcast %cst_7 : f32 to vector<2x8x128xf32>
    %15 = vector.extract_strided_slice %13 {offsets = [0, 0, 0], sizes = [2, 8, 128], strides = [1, 1, 1]} : vector<2x16x128xf32> to vector<2x8x128xf32>
    %16 = tpu.concatenate %14, %15 in 1 : vector<2x8x128xf32>, vector<2x8x128xf32> -> vector<2x16x128xf32>
    %17 = vector.extract_strided_slice %13 {offsets = [0, 8, 0], sizes = [2, 8, 128], strides = [1, 1, 1]} : vector<2x16x128xf32> to vector<2x8x128xf32>
    %18 = tpu.concatenate %17, %14 in 1 : vector<2x8x128xf32>, vector<2x8x128xf32> -> vector<2x16x128xf32>
    %19 = tpu.concatenate %16, %13, %18 in 2 : vector<2x16x128xf32>, vector<2x16x128xf32>, vector<2x16x128xf32> -> vector<2x16x384xf32>
    %20 = vector.shape_cast %19 : vector<2x16x384xf32> to vector<32x384xf32>
    %c0_8 = arith.constant 0 : index
    %c0_9 = arith.constant 0 : index
    %21 = vector.load %arg3[%c0_8, %c0_9] : memref<384x128xf32, #tpu.memory_space<vmem>>, vector<384x128xf32>
    %cst_10 = arith.constant dense<0.000000e+00> : vector<32x128xf32>
    %22 = tpu.matmul %20, %21, %cst_10 {dimension_numbers = #tpu.dot_dimension_numbers<[1], [0], [0], [1], [0, 0, 1, 1], [], []>} : vector<32x384xf32>, vector<384x128xf32>, vector<32x128xf32> -> vector<32x128xf32>
    %c0_11 = arith.constant 0 : index
    %c0_12 = arith.constant 0 : index
    %23 = vector.load %arg5[%c0_11, %c0_12] : memref<1x128xf32, #tpu.memory_space<vmem>>, vector<1x128xf32>
    %24 = vector.broadcast %23 : vector<1x128xf32> to vector<32x128xf32>
    %25 = arith.addf %22, %24 : vector<32x128xf32>
    %26 = vector.shape_cast %25 : vector<32x128xf32> to vector<2x16x128xf32>
    %27 = arith.addf %26, %2 : vector<2x16x128xf32>
    %cst_13 = arith.constant 0.000000e+00 : f32
    %28 = vector.broadcast %cst_13 : f32 to vector<2x16x128xf32>
    %29 = arith.maximumf %27, %28 : vector<2x16x128xf32>
    %c0_14 = arith.constant 0 : index
    %c0_15 = arith.constant 0 : index
    %c0_16 = arith.constant 0 : index
    %30 = vector.load %arg6[%c0_14, %c0_15, %c0_16] : memref<2x16x128xf32, #tpu.memory_space<vmem>>, vector<2x16x128xf32>
    tpu.vector_store %arg6[%c0_14, %c0_15, %c0_16], %29 {strides = array<i32>} : memref<2x16x128xf32, #tpu.memory_space<vmem>>, vector<2x16x128xf32>,
    return
  }
  func.func @transform_0(%arg0: i32) -> (i32, i32, i32) {
    %c0_i32 = arith.constant 0 : i32
    %c0_i32_0 = arith.constant 0 : i32
    %c0_i32_1 = arith.constant 0 : i32
    return %arg0, %c0_i32, %c0_i32_0 : i32, i32, i32
  }
  func.func @transform_1(%arg0: i32) -> (i32, i32) {
    %c0_i32 = arith.constant 0 : i32
    %c0_i32_0 = arith.constant 0 : i32
    %c0_i32_1 = arith.constant 0 : i32
    return %c0_i32, %c0_i32_0 : i32, i32
  }
  func.func @transform_2(%arg0: i32) -> (i32, i32) {
    %c0_i32 = arith.constant 0 : i32
    %c0_i32_0 = arith.constant 0 : i32
    %c0_i32_1 = arith.constant 0 : i32
    return %c0_i32, %c0_i32_0 : i32, i32
  }
  func.func @transform_3(%arg0: i32) -> (i32, i32) {
    %c0_i32 = arith.constant 0 : i32
    %c0_i32_0 = arith.constant 0 : i32
    %c0_i32_1 = arith.constant 0 : i32
    return %c0_i32, %c0_i32_0 : i32, i32
  }
  func.func @transform_4(%arg0: i32) -> (i32, i32) {
    %c0_i32 = arith.constant 0 : i32
    %c0_i32_0 = arith.constant 0 : i32
    %c0_i32_1 = arith.constant 0 : i32
    return %c0_i32, %c0_i32_0 : i32, i32
  }
  func.func @transform_5(%arg0: i32) -> (i32, i32, i32) {
    %c0_i32 = arith.constant 0 : i32
    %c0_i32_0 = arith.constant 0 : i32
    %c0_i32_1 = arith.constant 0 : i32
    return %arg0, %c0_i32, %c0_i32_0 : i32, i32, i32
  }
}

</mosaic_0001>

<llo_original>
// kernel: tpu_custom_call.1
$region0: #{tpu_custom_call.1}
  #allocation0 [shape = 'u32[]', space=smem, size = 0x4, offset = 0x4, fixed_abs, tag = 'smem constant byte address 0x4 - core index']
  #allocation1 [shape = 'u32[72,128]{1,0:T(1,128)}', space=vmem, size = 0x9000, scoped, tag = 'internal scratch']
  %s0 = inlined_call_operand.hbm [shape: f32[2,24,128], index: 0, kind: input, shape index: {}]
  %s1 = inlined_call_operand.hbm [shape: f32[384,128], index: 1, kind: input, shape index: {}]
  %s2 = inlined_call_operand.hbm [shape: f32[384,128], index: 2, kind: input, shape index: {}]
  %s3 = inlined_call_operand.vmem [shape: f32[1,128], index: 3, kind: input, shape index: {}]
  %s4 = inlined_call_operand.vmem [shape: f32[1,128], index: 4, kind: input, shape index: {}]
  %s5 = inlined_call_operand.hbm [shape: f32[2,16,128], index: 5, kind: output, shape index: {}]
  %s6 = sld [smem:[#allocation0]]
  $region42: #{tpu_custom_call.1} parent=0
    _
  %s8 = ssub.s32 1, %s6
  %s9 = scalar_select 0, %s8, %s6
  $region1: #{tpu_custom_call.1} parent=0
    #allocation2 [shape = 'u8[24576]{0}', space=vmem, size = 0x6000, scoped, tag = 'input window, operand 0, single buffered']
    #allocation3 [shape = 's32[1]{0}', space=sflag, size = 0x4, scoped, tag = 'scoped memory for tpu_custom_call.1']
    #allocation4 [shape = 's32[1]{0}', space=sflag, size = 0x4, scoped, tag = 'scoped memory for tpu_custom_call.1']
    #allocation5 [shape = 'u8[196608]{0}', space=vmem, size = 0x30000, scoped, tag = 'input window, operand 1, single buffered']
    #allocation6 [shape = 's32[1]{0}', space=sflag, size = 0x4, scoped, tag = 'scoped memory for tpu_custom_call.1']
    #allocation7 [shape = 'u8[196608]{0}', space=vmem, size = 0x30000, scoped, tag = 'input window, operand 2, single buffered']
    #allocation8 [shape = 'u8[16384]{0}', space=vmem, size = 0x4000, scoped, tag = 'output window, operand 0, single buffered']
    %10 = vsyncpa [#allocation3], 0
    %11 = vsyncpa [#allocation6], 0
    %12 = vsyncpa [#allocation4], 0
    // Predicated region
    $region2: #{tpu_custom_call.1} parent=1 // pred_check
      _
    $region3: #{tpu_custom_call.1} parent=1 // pred_check_branch
      %14 = sbr.rel (0) target = $region5
    $region4: #{tpu_custom_call.1} parent=1 // pred_region
      %16 = vsyncadd [#allocation3], 0
      %s17 = sshll.u32 %s0, 4
      %s18 = int_to_ptr.hbm [resolvable:$true] %s17
      %s19 = sshll.u32 [#allocation2], 4
      %s20 = int_to_ptr.vmem [resolvable:$true] %s19
      %25 = dma.hbm_to_vmem [thread:$0]  %s18, 768, %s20, [#allocation3], 128, 128, 8
    $region5: #{tpu_custom_call.1} parent=1 // pred_fallthru
      _
    // Predicated region
    $region6: #{tpu_custom_call.1} parent=1 // pred_check
      _
    $region7: #{tpu_custom_call.1} parent=1 // pred_check_branch
      %27 = sbr.rel (0) target = $region9
    $region8: #{tpu_custom_call.1} parent=1 // pred_region
      %29 = vsyncadd [#allocation6], 0
      %s30 = sshll.u32 %s1, 4
      %s31 = int_to_ptr.hbm [resolvable:$true] %s30
      %s32 = sshll.u32 [#allocation5], 4
      %s33 = int_to_ptr.vmem [resolvable:$true] %s32
      %38 = dma.hbm_to_vmem [thread:$0]  %s31, 6144, %s33, [#allocation6], 128, 128, 8
    $region9: #{tpu_custom_call.1} parent=1 // pred_fallthru
      _
    // Predicated region
    $region10: #{tpu_custom_call.1} parent=1 // pred_check
      _
    $region11: #{tpu_custom_call.1} parent=1 // pred_check_branch
      %40 = sbr.rel (0) target = $region13
    $region12: #{tpu_custom_call.1} parent=1 // pred_region
      %42 = vsyncadd [#allocation6], 0
      %s43 = sshll.u32 %s2, 4
      %s44 = int_to_ptr.hbm [resolvable:$true] %s43
      %s45 = sshll.u32 [#allocation7], 4
      %s46 = int_to_ptr.vmem [resolvable:$true] %s45
      %51 = dma.hbm_to_vmem [thread:$0]  %s44, 6144, %s46, [#allocation6], 128, 128, 8
    $region13: #{tpu_custom_call.1} parent=1 // pred_fallthru
      _
    // Predicated region
    $region14: #{tpu_custom_call.1} parent=1 // pred_check
      _
    $region15: #{tpu_custom_call.1} parent=1 // pred_check_branch
      %53 = sbr.rel (0) target = $region17
    $region16: #{tpu_custom_call.1} parent=1 // pred_region
      _
    $region17: #{tpu_custom_call.1} parent=1 // pred_fallthru
      _
    // Predicated region
    $region18: #{tpu_custom_call.1} parent=1 // pred_check
      _
    $region19: #{tpu_custom_call.1} parent=1 // pred_check_branch
      %55 = sbr.rel (0) target = $region21
    $region20: #{tpu_custom_call.1} parent=1 // pred_region
      _
    $region21: #{tpu_custom_call.1} parent=1 // pred_fallthru
      _
    // Predicated region
    $region22: #{tpu_custom_call.1} parent=1 // pred_check
      _
    $region23: #{tpu_custom_call.1} parent=1 // pred_check_branch
      %57 = sbr.rel (0) target = $region25
    $region24: #{tpu_custom_call.1} parent=1 // pred_region
      %59 = dma.done [#allocation3], 768
    $region25: #{tpu_custom_call.1} parent=1 // pred_fallthru
      _
    // Predicated region
    $region26: #{tpu_custom_call.1} parent=1 // pred_check
      _
    $region27: #{tpu_custom_call.1} parent=1 // pred_check_branch
      %61 = sbr.rel (0) target = $region29
    $region28: #{tpu_custom_call.1} parent=1 // pred_region
      %63 = dma.done [#allocation6], 6144
    $region29: #{tpu_custom_call.1} parent=1 // pred_fallthru
      _
    // Predicated region
    $region30: #{tpu_custom_call.1} parent=1 // pred_check
      _
    $region31: #{tpu_custom_call.1} parent=1 // pred_check_branch
      %65 = sbr.rel (0) target = $region33
    $region32: #{tpu_custom_call.1} parent=1 // pred_region
      %67 = dma.done [#allocation6], 6144
    $region33: #{tpu_custom_call.1} parent=1 // pred_fallthru
      _
    %v68 = vld [vmem:[#allocation2] sm:$0xff]
    %v69 = vld [vmem:[#allocation2 + $0x8] sm:$0xff]
    %v70 = vld [vmem:[#allocation2 + $0x10] sm:$0xff]
    %v71 = vld [vmem:[#allocation2 + $0x18] sm:$0xff]
    %v72 = vld [vmem:[#allocation2 + $0x20] sm:$0xff]
    %v73 = vld [vmem:[#allocation2 + $0x28] sm:$0xff]
    %vm80 = vcmask 1043456
    %v81 = vrot.slane %v68, 4
    %v82 = vrot.slane %v69, 4
    %v83 = vsel %vm80, %v81, %v82
    %v84 = vrot.slane %v70, 4
    %v85 = vsel %vm80, %v82, %v84
    %v86 = vrot.slane %v71, 4
    %v87 = vrot.slane %v72, 4
    %v88 = vsel %vm80, %v86, %v87
    %v89 = vrot.slane %v73, 4
    %v90 = vsel %vm80, %v87, %v89
    %v95 = vld [vmem:[#allocation5] sm:$0xff]
    %v96 = vld [vmem:[#allocation5 + $0x8] sm:$0xff]
    %v97 = vld [vmem:[#allocation5 + $0x10] sm:$0xff]
    %v98 = vld [vmem:[#allocation5 + $0x18] sm:$0xff]
    %v99 = vld [vmem:[#allocation5 + $0x20] sm:$0xff]
    %v100 = vld [vmem:[#allocation5 + $0x28] sm:$0xff]
    %v101 = vld [vmem:[#allocation5 + $0x30] sm:$0xff]
    %v102 = vld [vmem:[#allocation5 + $0x38] sm:$0xff]
    %v103 = vld [vmem:[#allocation5 + $0x40] sm:$0xff]
    %v104 = vld [vmem:[#allocation5 + $0x48] sm:$0xff]
    %v105 = vld [vmem:[#allocation5 + $0x50] sm:$0xff]
    %v106 = vld [vmem:[#allocation5 + $0x58] sm:$0xff]
    %v107 = vld [vmem:[#allocation5 + $0x60] sm:$0xff]
    %v108 = vld [vmem:[#allocation5 + $0x68] sm:$0xff]
    %v109 = vld [vmem:[#allocation5 + $0x70] sm:$0xff]
    %v110 = vld [vmem:[#allocation5 + $0x78] sm:$0xff]
    %v111 = vld [vmem:[#allocation5 + $0x80] sm:$0xff]
    %v112 = vld [vmem:[#allocation5 + $0x88] sm:$0xff]
    %v113 = vld [vmem:[#allocation5 + $0x90] sm:$0xff]
    %v114 = vld [vmem:[#allocation5 + $0x98] sm:$0xff]
    %v115 = vld [vmem:[#allocation5 + $0xa0] sm:$0xff]
    %v116 = vld [vmem:[#allocation5 + $0xa8] sm:$0xff]
    %v117 = vld [vmem:[#allocation5 + $0xb0] sm:$0xff]
    %v118 = vld [vmem:[#allocation5 + $0xb8] sm:$0xff]
    %v119 = vld [vmem:[#allocation5 + $0xc0] sm:$0xff]
    %v120 = vld [vmem:[#allocation5 + $0xc8] sm:$0xff]
    %v121 = vld [vmem:[#allocation5 + $0xd0] sm:$0xff]
    %v122 = vld [vmem:[#allocation5 + $0xd8] sm:$0xff]
    %v123 = vld [vmem:[#allocation5 + $0xe0] sm:$0xff]
    %v124 = vld [vmem:[#allocation5 + $0xe8] sm:$0xff]
    %v125 = vld [vmem:[#allocation5 + $0xf0] sm:$0xff]
    %v126 = vld [vmem:[#allocation5 + $0xf8] sm:$0xff]
    %v127 = vld [vmem:[#allocation5 + $0x100] sm:$0xff]
    %v128 = vld [vmem:[#allocation5 + $0x108] sm:$0xff]
    %v129 = vld [vmem:[#allocation5 + $0x110] sm:$0xff]
    %v130 = vld [vmem:[#allocation5 + $0x118] sm:$0xff]
    %v131 = vld [vmem:[#allocation5 + $0x120] sm:$0xff]
    %v132 = vld [vmem:[#allocation5 + $0x128] sm:$0xff]
    %v133 = vld [vmem:[#allocation5 + $0x130] sm:$0xff]
    %v134 = vld [vmem:[#allocation5 + $0x138] sm:$0xff]
    %v135 = vld [vmem:[#allocation5 + $0x140] sm:$0xff]
    %v136 = vld [vmem:[#allocation5 + $0x148] sm:$0xff]
    %v137 = vld [vmem:[#allocation5 + $0x150] sm:$0xff]
    %v138 = vld [vmem:[#allocation5 + $0x158] sm:$0xff]
    %v139 = vld [vmem:[#allocation5 + $0x160] sm:$0xff]
    %v140 = vld [vmem:[#allocation5 + $0x168] sm:$0xff]
    %v141 = vld [vmem:[#allocation5 + $0x170] sm:$0xff]
    %v142 = vld [vmem:[#allocation5 + $0x178] sm:$0xff]
    %v143 = vld [vmem:[%s3] sm:$0x1]
    %v145 = vperm.slane %v143, 0
    %147 = vmatpush.msra.mxu0 %v110
    %148 = vmatpush.msra.mxu0 %v109
    %149 = vmatpush.msra.mxu0 %v108
    %150 = vmatpush.msra.mxu0 %v107
    %151 = vmatpush.msra.mxu0 %v106
    %152 = vmatpush.msra.mxu0 %v105
    %153 = vmatpush.msra.mxu0 %v104
    %154 = vmatpush.msra.mxu0 %v103
    %155 = vmatpush.msra.mxu0 %v102
    %156 = vmatpush.msra.mxu0 %v101
    %157 = vmatpush.msra.mxu0 %v100
    %158 = vmatpush.msra.mxu0 %v99
    %159 = vmatpush.msra.mxu0 %v98
    %160 = vmatpush.msra.mxu0 %v97
    %161 = vmatpush.msra.mxu0 %v96
    %162 = vmatpush.msra.mxu0 %v95
    %163 = vmatmul.f32.gmra.mxu0 %v68
    %v164 = vpop.f32.mrf.mxu0
    %v165 = vadd.f32 %v145, %v164
    %166 = vmatmul.f32.gmra.mxu0 %v69
    %v167 = vpop.f32.mrf.mxu0
    %v168 = vadd.f32 %v145, %v167
    %169 = vmatmul.f32.gmra.mxu0 %v71
    %v170 = vpop.f32.mrf.mxu0
    %v171 = vadd.f32 %v145, %v170
    %172 = vmatmul.f32.gmra.mxu0 %v72
    %v173 = vpop.f32.mrf.mxu0
    %v174 = vadd.f32 %v145, %v173
    %175 = vdwg.mxu0
    %176 = vmatpush.msra.mxu0 %v126
    %177 = vmatpush.msra.mxu0 %v125
    %178 = vmatpush.msra.mxu0 %v124
    %179 = vmatpush.msra.mxu0 %v123
    %180 = vmatpush.msra.mxu0 %v122
    %181 = vmatpush.msra.mxu0 %v121
    %182 = vmatpush.msra.mxu0 %v120
    %183 = vmatpush.msra.mxu0 %v119
    %184 = vmatpush.msra.mxu0 %v118
    %185 = vmatpush.msra.mxu0 %v117
    %186 = vmatpush.msra.mxu0 %v116
    %187 = vmatpush.msra.mxu0 %v115
    %188 = vmatpush.msra.mxu0 %v114
    %189 = vmatpush.msra.mxu0 %v113
    %190 = vmatpush.msra.mxu0 %v112
    %191 = vmatpush.msra.mxu0 %v111
    %192 = vmatmul.f32.gmra.mxu0 %v83
    %v193 = vpop.f32.mrf.mxu0
    %v194 = vadd.f32 %v165, %v193
    %195 = vmatmul.f32.gmra.mxu0 %v85
    %v196 = vpop.f32.mrf.mxu0
    %v197 = vadd.f32 %v168, %v196
    %198 = vmatmul.f32.gmra.mxu0 %v88
    %v199 = vpop.f32.mrf.mxu0
    %v200 = vadd.f32 %v171, %v199
    %201 = vmatmul.f32.gmra.mxu0 %v90
    %v202 = vpop.f32.mrf.mxu0
    %v203 = vadd.f32 %v174, %v202
    %204 = vdwg.mxu0
    %205 = vmatpush.msra.mxu0 %v142
    %206 = vmatpush.msra.mxu0 %v141
    %207 = vmatpush.msra.mxu0 %v140
    %208 = vmatpush.msra.mxu0 %v139
    %209 = vmatpush.msra.mxu0 %v138
    %210 = vmatpush.msra.mxu0 %v137
    %211 = vmatpush.msra.mxu0 %v136
    %212 = vmatpush.msra.mxu0 %v135
    %213 = vmatpush.msra.mxu0 %v134
    %214 = vmatpush.msra.mxu0 %v133
    %215 = vmatpush.msra.mxu0 %v132
    %216 = vmatpush.msra.mxu0 %v131
    %217 = vmatpush.msra.mxu0 %v130
    %218 = vmatpush.msra.mxu0 %v129
    %219 = vmatpush.msra.mxu0 %v128
    %220 = vmatpush.msra.mxu0 %v127
    %221 = vmatmul.f32.gmra.mxu0 %v69
    %v222 = vpop.f32.mrf.mxu0
    %v223 = vadd.f32 %v194, %v222
    %224 = vmatmul.f32.gmra.mxu0 %v70
    %v225 = vpop.f32.mrf.mxu0
    %v226 = vadd.f32 %v197, %v225
    %227 = vmatmul.f32.gmra.mxu0 %v72
    %v228 = vpop.f32.mrf.mxu0
    %v229 = vadd.f32 %v200, %v228
    %230 = vmatmul.f32.gmra.mxu0 %v73
    %v231 = vpop.f32.mrf.mxu0
    %v232 = vadd.f32 %v203, %v231
    %233 = vdwg.mxu0
    %v234 = vmax.f32 %v223, 0.0
    %v235 = vmax.f32 %v226, 0.0
    %v236 = vmax.f32 %v229, 0.0
    %v237 = vmax.f32 %v232, 0.0
    %v238 = vld [vmem:[#allocation7] sm:$0xff]
    %v239 = vld [vmem:[#allocation7 + $0x8] sm:$0xff]
    %v240 = vld [vmem:[#allocation7 + $0x10] sm:$0xff]
    %v241 = vld [vmem:[#allocation7 + $0x18] sm:$0xff]
    %v242 = vld [vmem:[#allocation7 + $0x20] sm:$0xff]
    %v243 = vld [vmem:[#allocation7 + $0x28] sm:$0xff]
    %v244 = vld [vmem:[#allocation7 + $0x30] sm:$0xff]
    %v245 = vld [vmem:[#allocation7 + $0x38] sm:$0xff]
    %v246 = vld [vmem:[#allocation7 + $0x40] sm:$0xff]
    %v247 = vld [vmem:[#allocation7 + $0x48] sm:$0xff]
    %v248 = vld [vmem:[#allocation7 + $0x50] sm:$0xff]
    %v249 = vld [vmem:[#allocation7 + $0x58] sm:$0xff]
    %v250 = vld [vmem:[#allocation7 + $0x60] sm:$0xff]
    %v251 = vld [vmem:[#allocation7 + $0x68] sm:$0xff]
    %v252 = vld [vmem:[#allocation7 + $0x70] sm:$0xff]
    %v253 = vld [vmem:[#allocation7 + $0x78] sm:$0xff]
    %v254 = vld [vmem:[#allocation7 + $0x80] sm:$0xff]
    %v255 = vld [vmem:[#allocation7 + $0x88] sm:$0xff]
    %v256 = vld [vmem:[#allocation7 + $0x90] sm:$0xff]
    %v257 = vld [vmem:[#allocation7 + $0x98] sm:$0xff]
    %v258 = vld [vmem:[#allocation7 + $0xa0] sm:$0xff]
    %v259 = vld [vmem:[#allocation7 + $0xa8] sm:$0xff]
    %v260 = vld [vmem:[#allocation7 + $0xb0] sm:$0xff]
    %v261 = vld [vmem:[#allocation7 + $0xb8] sm:$0xff]
    %v262 = vld [vmem:[#allocation7 + $0xc0] sm:$0xff]
    %v263 = vld [vmem:[#allocation7 + $0xc8] sm:$0xff]
    %v264 = vld [vmem:[#allocation7 + $0xd0] sm:$0xff]
    %v265 = vld [vmem:[#allocation7 + $0xd8] sm:$0xff]
    %v266 = vld [vmem:[#allocation7 + $0xe0] sm:$0xff]
    %v267 = vld [vmem:[#allocation7 + $0xe8] sm:$0xff]
    %v268 = vld [vmem:[#allocation7 + $0xf0] sm:$0xff]
    %v269 = vld [vmem:[#allocation7 + $0xf8] sm:$0xff]
    %v270 = vld [vmem:[#allocation7 + $0x100] sm:$0xff]
    %v271 = vld [vmem:[#allocation7 + $0x108] sm:$0xff]
    %v272 = vld [vmem:[#allocation7 + $0x110] sm:$0xff]
    %v273 = vld [vmem:[#allocation7 + $0x118] sm:$0xff]
    %v274 = vld [vmem:[#allocation7 + $0x120] sm:$0xff]
    %v275 = vld [vmem:[#allocation7 + $0x128] sm:$0xff]
    %v276 = vld [vmem:[#allocation7 + $0x130] sm:$0xff]
    %v277 = vld [vmem:[#allocation7 + $0x138] sm:$0xff]
    %v278 = vld [vmem:[#allocation7 + $0x140] sm:$0xff]
    %v279 = vld [vmem:[#allocation7 + $0x148] sm:$0xff]
    %v280 = vld [vmem:[#allocation7 + $0x150] sm:$0xff]
    %v281 = vld [vmem:[#allocation7 + $0x158] sm:$0xff]
    %v282 = vld [vmem:[#allocation7 + $0x160] sm:$0xff]
    %v283 = vld [vmem:[#allocation7 + $0x168] sm:$0xff]
    %v284 = vld [vmem:[#allocation7 + $0x170] sm:$0xff]
    %v285 = vld [vmem:[#allocation7 + $0x178] sm:$0xff]
    %v286 = vld [vmem:[%s4] sm:$0x1]
    %v288 = vperm.slane %v286, 0
    %290 = vmatpush.msra.mxu0 %v253
    %291 = vmatpush.msra.mxu0 %v252
    %292 = vmatpush.msra.mxu0 %v251
    %293 = vmatpush.msra.mxu0 %v250
    %294 = vmatpush.msra.mxu0 %v249
    %295 = vmatpush.msra.mxu0 %v248
    %296 = vmatpush.msra.mxu0 %v247
    %297 = vmatpush.msra.mxu0 %v246
    %298 = vmatpush.msra.mxu0 %v245
    %299 = vmatpush.msra.mxu0 %v244
    %300 = vmatpush.msra.mxu0 %v243
    %301 = vmatpush.msra.mxu0 %v242
    %302 = vmatpush.msra.mxu0 %v241
    %303 = vmatpush.msra.mxu0 %v240
    %304 = vmatpush.msra.mxu0 %v239
    %305 = vmatpush.msra.mxu0 %v238
    %306 = vmatmul.f32.gmra.mxu0 0.0
    %v307 = vpop.f32.mrf.mxu0
    %v308 = vadd.f32 %v288, %v307
    %309 = vmatmul.f32.gmra.mxu0 %v234
    %v310 = vpop.f32.mrf.mxu0
    %v311 = vadd.f32 %v288, %v310
    %312 = vmatmul.f32.gmra.mxu0 0.0
    %v313 = vpop.f32.mrf.mxu0
    %v314 = vadd.f32 %v288, %v313
    %315 = vmatmul.f32.gmra.mxu0 %v236
    %v316 = vpop.f32.mrf.mxu0
    %v317 = vadd.f32 %v288, %v316
    %318 = vdwg.mxu0
    %319 = vmatpush.msra.mxu0 %v269
    %320 = vmatpush.msra.mxu0 %v268
    %321 = vmatpush.msra.mxu0 %v267
    %322 = vmatpush.msra.mxu0 %v266
    %323 = vmatpush.msra.mxu0 %v265
    %324 = vmatpush.msra.mxu0 %v264
    %325 = vmatpush.msra.mxu0 %v263
    %326 = vmatpush.msra.mxu0 %v262
    %327 = vmatpush.msra.mxu0 %v261
    %328 = vmatpush.msra.mxu0 %v260
    %329 = vmatpush.msra.mxu0 %v259
    %330 = vmatpush.msra.mxu0 %v258
    %331 = vmatpush.msra.mxu0 %v257
    %332 = vmatpush.msra.mxu0 %v256
    %333 = vmatpush.msra.mxu0 %v255
    %334 = vmatpush.msra.mxu0 %v254
    %335 = vmatmul.f32.gmra.mxu0 %v234
    %v336 = vpop.f32.mrf.mxu0
    %v337 = vadd.f32 %v308, %v336
    %338 = vmatmul.f32.gmra.mxu0 %v235
    %v339 = vpop.f32.mrf.mxu0
    %v340 = vadd.f32 %v311, %v339
    %341 = vmatmul.f32.gmra.mxu0 %v236
    %v342 = vpop.f32.mrf.mxu0
    %v343 = vadd.f32 %v314, %v342
    %344 = vmatmul.f32.gmra.mxu0 %v237
    %v345 = vpop.f32.mrf.mxu0
    %v346 = vadd.f32 %v317, %v345
    %347 = vdwg.mxu0
    %348 = vmatpush.msra.mxu0 %v285
    %349 = vmatpush.msra.mxu0 %v284
    %350 = vmatpush.msra.mxu0 %v283
    %351 = vmatpush.msra.mxu0 %v282
    %352 = vmatpush.msra.mxu0 %v281
    %353 = vmatpush.msra.mxu0 %v280
    %354 = vmatpush.msra.mxu0 %v279
    %355 = vmatpush.msra.mxu0 %v278
    %356 = vmatpush.msra.mxu0 %v277
    %357 = vmatpush.msra.mxu0 %v276
    %358 = vmatpush.msra.mxu0 %v275
    %359 = vmatpush.msra.mxu0 %v274
    %360 = vmatpush.msra.mxu0 %v273
    %361 = vmatpush.msra.mxu0 %v272
    %362 = vmatpush.msra.mxu0 %v271
    %363 = vmatpush.msra.mxu0 %v270
    %364 = vmatmul.f32.gmra.mxu0 %v235
    %v365 = vpop.f32.mrf.mxu0
    %v366 = vadd.f32 %v337, %v365
    %367 = vmatmul.f32.gmra.mxu0 0.0
    %v368 = vpop.f32.mrf.mxu0
    %v369 = vadd.f32 %v340, %v368
    %370 = vmatmul.f32.gmra.mxu0 %v237
    %v371 = vpop.f32.mrf.mxu0
    %v372 = vadd.f32 %v343, %v371
    %373 = vmatmul.f32.gmra.mxu0 0.0
    %v374 = vpop.f32.mrf.mxu0
    %v375 = vadd.f32 %v346, %v374
    %376 = vdwg.mxu0
    %v377 = vadd.f32 %v366, %v83
    %v378 = vadd.f32 %v369, %v85
    %v379 = vadd.f32 %v372, %v88
    %v380 = vadd.f32 %v375, %v90
    %v381 = vmax.f32 %v377, 0.0
    %v382 = vmax.f32 %v378, 0.0
    %v383 = vmax.f32 %v379, 0.0
    %v384 = vmax.f32 %v380, 0.0
    %385 = vst [vmem:[#allocation8] sm:$0xff] %v381
    %386 = vst [vmem:[#allocation8 + $0x8] sm:$0xff] %v382
    %387 = vst [vmem:[#allocation8 + $0x10] sm:$0xff] %v383
    %388 = vst [vmem:[#allocation8 + $0x18] sm:$0xff] %v384
    // Predicated region
    $region34: #{tpu_custom_call.1} parent=1 // pred_check
      _
    $region35: #{tpu_custom_call.1} parent=1 // pred_check_branch
      %390 = sbr.rel (0) target = $region37
    $region36: #{tpu_custom_call.1} parent=1 // pred_region
      %392 = vsyncadd [#allocation4], 0
      %s393 = sshll.u32 [#allocation8], 4
      %s394 = int_to_ptr.vmem [resolvable:$true] %s393
      %s395 = sshll.u32 %s5, 4
      %s396 = int_to_ptr.hbm [resolvable:$true] %s395
      %401 = dma.vmem_to_hbm [thread:$0]  %s394, 512, %s396, [#allocation4], 128, 128, 8
    $region37: #{tpu_custom_call.1} parent=1 // pred_fallthru
      _
    // Predicated region
    $region38: #{tpu_custom_call.1} parent=1 // pred_check
      _
    $region39: #{tpu_custom_call.1} parent=1 // pred_check_branch
      %403 = sbr.rel (0) target = $region41
    $region40: #{tpu_custom_call.1} parent=1 // pred_region
      %405 = dma.done [#allocation4], 512
    $region41: #{tpu_custom_call.1} parent=1 // pred_fallthru
      _
    %406 = vsyncpa [#allocation3], 1
    %407 = vsyncpa [#allocation6], 1
    %408 = vsyncpa [#allocation4], 1

</llo_original>
